<compile_context>
chip_gen: v7x
topology: tpu7x:2x2x1
jax: 0.10.0
libtpu: 0.0.40
codegen_flags: <defaults>
</compile_context>

<pallas_src>
import numpy as np
import jax
import jax.numpy as jnp
from jax import lax
from jax.experimental import pallas as pl
from jax.experimental.pallas import tpu as pltpu

_TWO_PI = 2.0 * np.pi
_HALF_PI = 0.5 * np.pi


def _round_up(n, m):
    return ((n + m - 1) // m) * m


def _fourier_kernel(x_ref, w_ref, phase_ref, mask_ref, out_ref):
    # x_ref:     (tb, C)        VMEM tile
    # w_ref:     (C, width)     VMEM resident: [I_C | 2*pi*B | 2*pi*B]
    # phase_ref: (1, width)     VMEM resident: pi/2 in the cos block, else 0
    # mask_ref:  (1, width)     VMEM resident: 1.0 on trig cols, 0.0 on x cols
    # out_ref:   (tb, width)    fused [x | sin | cos]
    x = x_ref[...].astype(jnp.float32)
    # MXU matmul (K = C is tiny, but the MXU slot is idle either way; this
    # frees VALU/XLU slots that the old broadcast-MAC path burned).
    res = jnp.dot(x, w_ref[...],
                  preferred_element_type=jnp.float32,
                  precision=jax.lax.Precision.HIGHEST)
    # cos(t) == sin(t + pi/2): one resident-row add covers the cos block.
    res = res + phase_ref[...]
    # Single select: passthrough columns keep res (== x via I_C), trig
    # columns get sin.  EUP (sin) count identical to the sin+cos original.
    fused = jnp.where(mask_ref[...] > 0.5, jnp.sin(res), res)
    out_ref[...] = fused.astype(out_ref.dtype)


def _pick_tile_rows(batch, channels, width, in_itemsize, out_itemsize):
    """Row tile from a lane-padded VMEM model (fixes prior under-counting)."""
    c_pad = _round_up(max(channels, 1), 128)
    w_pad = _round_up(max(width, 1), 128)
    per_row = (2 * in_itemsize * c_pad       # x block, double-buffered, padded
               + 2 * out_itemsize * w_pad    # out block, double-buffered, padded
               + 2 * 4 * w_pad)              # fp32 res/fused intermediates
    try:
        vmem_cap = int(pltpu.get_tpu_info().vmem_capacity_bytes)
    except Exception:
        vmem_cap = 64 << 20                  # smallest per-TC VMEM (v7x)
    # Keep the real (padded) footprint inside v5e's 16 MiB scoped default and
    # comfortably under v7x's 64 MiB physical VMEM.
    budget = min(vmem_cap // 4, 12 << 20)
    tb = max(8, (budget // per_row // 8) * 8)
    tb = min(tb, 1024)                       # >=512-row tiles ~85% of HBM roofline
    # Aim for up to 8 grid steps (>=4 per TC on v7x) while keeping every step
    # >= 128 rows so the ~0.35us/step overhead stays amortized.
    steps = min(8, max(1, batch // 128))
    tb = min(tb, _round_up(pl.cdiv(batch, steps), 8))
    if tb >= batch:
        return batch                         # full-dim block is always legal
    return max(8, (tb // 8) * 8)


def fourier_feature_transform(x, B, *, tb=None, out_dtype=None):
    """x: [batch, C]; B: [C, M]. Returns concat([x, sin(2*pi*xB), cos(2*pi*xB)], 1)."""
    batch, channels = x.shape
    c_b, mapping_size = B.shape
    assert channels == c_b, (
        f"Expected input to have {c_b} channels (got {channels} channels)")
    width = channels + 2 * mapping_size
    out_dtype = x.dtype if out_dtype is None else out_dtype   # bf16 knob if allowed
    in_itemsize = max(jnp.dtype(x.dtype).itemsize, 1)
    out_itemsize = max(jnp.dtype(out_dtype).itemsize, 1)

    # Resident constants, built once in plain JAX (folds the 2*pi scale).
    b_scaled = B.astype(jnp.float32) * jnp.float32(_TWO_PI)
    W = jnp.concatenate(
        [jnp.eye(channels, dtype=jnp.float32), b_scaled, b_scaled], axis=1)
    phase = jnp.concatenate(
        [jnp.zeros((1, channels + mapping_size), jnp.float32),
         jnp.full((1, mapping_size), _HALF_PI, jnp.float32)], axis=1)
    mask = jnp.concatenate(
        [jnp.zeros((1, channels), jnp.float32),
         jnp.ones((1, 2 * mapping_size), jnp.float32)], axis=1)

    if tb is None:
        tb = _pick_tile_rows(batch, channels, width, in_itemsize, out_itemsize)
    else:
        tb = min(tb, batch)
        if tb != batch:
            tb = max(8, (tb // 8) * 8)       # respect (8,128) divisibility
    grid = (pl.cdiv(batch, tb),)

    # Explicit scoped-VMEM limit derived from the true (lane-padded) footprint.
    c_pad = _round_up(channels, 128)
    w_pad = _round_up(width, 128)
    tb_pad = _round_up(tb, 8)
    footprint = (2 * in_itemsize * tb_pad * c_pad        # x, double-buffered
                 + 2 * out_itemsize * tb_pad * w_pad     # out, double-buffered
                 + 2 * 4 * tb_pad * w_pad                # fp32 intermediates
                 + 2 * 4 * _round_up(channels, 8) * w_pad   # resident W
                 + 2 * 2 * 4 * 8 * w_pad)                # resident phase + mask
    vmem_limit = int(min(48 << 20, max(24 << 20, 2 * footprint)))

    cost = pl.CostEstimate(
        flops=2 * batch * channels * width + 2 * batch * width,
        transcendentals=batch * 2 * mapping_size,
        bytes_accessed=(in_itemsize * batch * channels
                        + 4 * (channels + 2) * width
                        + out_itemsize * batch * width),
    )

    out = pl.pallas_call(
        _fourier_kernel,
        out_shape=jax.ShapeDtypeStruct((batch, width), out_dtype),
        grid_spec=pltpu.PrefetchScalarGridSpec(
            num_scalar_prefetch=0,
            grid=grid,
            in_specs=[
                pl.BlockSpec((tb, channels), lambda i: (i, 0)),      # x tile
                pl.BlockSpec((channels, width), lambda i: (0, 0)),   # W resident
                pl.BlockSpec((1, width), lambda i: (0, 0)),          # phase row
                pl.BlockSpec((1, width), lambda i: (0, 0)),          # mask row
            ],
            out_specs=pl.BlockSpec((tb, width), lambda i: (i, 0)),   # fused out
        ),
        compiler_params=pltpu.CompilerParams(
            dimension_semantics=("parallel",),
            vmem_limit_bytes=vmem_limit),
        cost_estimate=cost,
    )(x, W, phase, mask)
    return out


def make_B(key, num_input_channels, mapping_size, scale):
    """Deterministic stand-in for the module's buffer:
    B = randn(C, M) * scale, rows sorted by ascending L2 norm."""
    B = jax.random.normal(key, (num_input_channels, mapping_size),
                          dtype=jnp.float32) * scale
    norms = jnp.linalg.norm(B, axis=1)
    order = jnp.argsort(norms)
    return B[order]


if __name__ == "__main__":
    key = jax.random.PRNGKey(0)
    k_x, k_b = jax.random.split(key)

    batch = 8
    num_input_channels = 4
    mapping_size = 64
    scale = 10.0

    x = jax.random.normal(k_x, (batch, num_input_channels), dtype=jnp.float32)
    B = make_B(k_b, num_input_channels, mapping_size, scale)

    ff = jax.jit(fourier_feature_transform)
    out = jax.block_until_ready(ff(x, B))

    # Reference check (pure JAX, mirrors the torch math).
    res_ref = (x @ B) * (2.0 * np.pi)
    ref = jnp.concatenate([x, jnp.sin(res_ref), jnp.cos(res_ref)], axis=1)
    assert out.shape == (batch, num_input_channels + 2 * mapping_size)
    # x-passthrough columns go through the MXU identity block (HIGHEST
    # precision) -> near-exact but not guaranteed bitwise.
    np.testing.assert_allclose(np.asarray(out[:, :num_input_channels]),
                               np.asarray(x), rtol=1e-5, atol=1e-5)
    # Trig columns: 2*pi folding + cos-as-sin(t+pi/2) change rounding order at
    # large phases (scale=10), so compare with a slightly looser tolerance.
    np.testing.assert_allclose(np.asarray(out), np.asarray(ref),
                               rtol=2e-3, atol=2e-3)

    print("KERNEL_OK")
</pallas_src>

<mosaic_0001>
module attributes {stable_mosaic.version = 11 : i64} {
  func.func @_fourier_kernel(%arg0: i32, %arg1: memref<8x4xf32, #tpu.memory_space<vmem>>, %arg2: memref<4x132xf32, #tpu.memory_space<vmem>>, %arg3: memref<1x132xf32, #tpu.memory_space<vmem>>, %arg4: memref<1x132xf32, #tpu.memory_space<vmem>>, %arg5: memref<8x132xf32, #tpu.memory_space<vmem>>) attributes {dimension_semantics = [#tpu.dimension_semantics<parallel>], iteration_bounds = array<i64: 1>, scalar_prefetch = 0 : i64, scratch_operands = 0 : i64, tpu.core_type = #tpu.core_type<tc>, window_params = [{transform_indices = @transform_0, window_bounds = array<i64: 8, 4>}, {pipeline_mode = #tpu.pipeline_mode<synchronous>, transform_indices = @transform_1, window_bounds = array<i64: 4, 132>}, {pipeline_mode = #tpu.pipeline_mode<synchronous>, transform_indices = @transform_2, window_bounds = array<i64: 1, 132>}, {pipeline_mode = #tpu.pipeline_mode<synchronous>, transform_indices = @transform_3, window_bounds = array<i64: 1, 132>}, {transform_indices = @transform_4, window_bounds = array<i64: 8, 132>}]} {
    %c0 = arith.constant 0 : index
    %c0_0 = arith.constant 0 : index
    %0 = vector.load %arg1[%c0, %c0_0] : memref<8x4xf32, #tpu.memory_space<vmem>>, vector<8x4xf32>
    %c0_1 = arith.constant 0 : index
    %c0_2 = arith.constant 0 : index
    %1 = vector.load %arg2[%c0_1, %c0_2] : memref<4x132xf32, #tpu.memory_space<vmem>>, vector<4x132xf32>
    %cst = arith.constant dense<0.000000e+00> : vector<8x132xf32>
    %2 = tpu.matmul %0, %1, %cst {dimension_numbers = #tpu.dot_dimension_numbers<[1], [0], [0], [1], [0, 0, 1, 1], [], []>, precision = #tpu.contract_precision<fp32>} : vector<8x4xf32>, vector<4x132xf32>, vector<8x132xf32> -> vector<8x132xf32>
    %c0_3 = arith.constant 0 : index
    %c0_4 = arith.constant 0 : index
    %3 = vector.load %arg3[%c0_3, %c0_4] : memref<1x132xf32, #tpu.memory_space<vmem>>, vector<1x132xf32>
    %4 = vector.broadcast %3 : vector<1x132xf32> to vector<8x132xf32>
    %5 = arith.addf %2, %4 : vector<8x132xf32>
    %c0_5 = arith.constant 0 : index
    %c0_6 = arith.constant 0 : index
    %6 = vector.load %arg4[%c0_5, %c0_6] : memref<1x132xf32, #tpu.memory_space<vmem>>, vector<1x132xf32>
    %cst_7 = arith.constant 5.000000e-01 : f32
    %7 = vector.broadcast %cst_7 : f32 to vector<1x132xf32>
    %8 = arith.cmpf ogt, %6, %7 : vector<1x132xf32>
    %9 = math.sin %5 : vector<8x132xf32>
    %10 = vector.shape_cast %8 : vector<1x132xi1> to vector<1x132xi1>
    %11 = vector.broadcast %10 : vector<1x132xi1> to vector<8x132xi1>
    %12 = arith.select %11, %9, %5 : vector<8x132xi1>, vector<8x132xf32>
    %c0_8 = arith.constant 0 : index
    %c0_9 = arith.constant 0 : index
    %13 = vector.load %arg5[%c0_8, %c0_9] : memref<8x132xf32, #tpu.memory_space<vmem>>, vector<8x132xf32>
    tpu.vector_store %arg5[%c0_8, %c0_9], %12 {strides = array<i32>} : memref<8x132xf32, #tpu.memory_space<vmem>>, vector<8x132xf32>,
    return
  }
  func.func @transform_0(%arg0: i32) -> (i32, i32) {
    %c0_i32 = arith.constant 0 : i32
    %c0_i32_0 = arith.constant 0 : i32
    return %arg0, %c0_i32 : i32, i32
  }
  func.func @transform_1(%arg0: i32) -> (i32, i32) {
    %c0_i32 = arith.constant 0 : i32
    %c0_i32_0 = arith.constant 0 : i32
    %c0_i32_1 = arith.constant 0 : i32
    return %c0_i32, %c0_i32_0 : i32, i32
  }
  func.func @transform_2(%arg0: i32) -> (i32, i32) {
    %c0_i32 = arith.constant 0 : i32
    %c0_i32_0 = arith.constant 0 : i32
    %c0_i32_1 = arith.constant 0 : i32
    return %c0_i32, %c0_i32_0 : i32, i32
  }
  func.func @transform_3(%arg0: i32) -> (i32, i32) {
    %c0_i32 = arith.constant 0 : i32
    %c0_i32_0 = arith.constant 0 : i32
    %c0_i32_1 = arith.constant 0 : i32
    return %c0_i32, %c0_i32_0 : i32, i32
  }
  func.func @transform_4(%arg0: i32) -> (i32, i32) {
    %c0_i32 = arith.constant 0 : i32
    %c0_i32_0 = arith.constant 0 : i32
    return %arg0, %c0_i32 : i32, i32
  }
}

</mosaic_0001>

<llo_original>
// kernel: fourier_feature_transform.1
$region0: #{fourier_feature_transform.1}
  #allocation0 [shape = 'u32[]', space=smem, size = 0x4, offset = 0x4, fixed_abs, tag = 'smem constant byte address 0x4 - core index']
  #allocation1 [shape = 'u32[144,128]{1,0:T(1,128)}', space=vmem, size = 0x12000, scoped, tag = 'internal scratch']
  %s0 = inlined_call_operand.vmem [shape: f32[8,4], index: 0, kind: input, shape index: {}]
  %s1 = inlined_call_operand.vmem [shape: f32[4,132], index: 1, kind: input, shape index: {}]
  %s2 = inlined_call_operand.vmem [shape: f32[1,132], index: 2, kind: input, shape index: {}]
  %s3 = inlined_call_operand.vmem [shape: f32[1,132], index: 3, kind: input, shape index: {}]
  %s4 = inlined_call_operand.hbm [shape: f32[8,132], index: 4, kind: output, shape index: {}]
  %s5 = sld [smem:[#allocation0]]
  $region26: #{fourier_feature_transform.1} parent=0
    _
  %s7 = ssub.s32 1, %s5
  %s8 = scalar_select 0, %s7, %s5
  $region1: #{fourier_feature_transform.1} parent=0
    #allocation2 [shape = 'u8[8192]{0}', space=vmem, size = 0x2000, scoped, tag = 'output window, operand 0, single buffered']
    #allocation3 [shape = 's32[1]{0}', space=sflag, size = 0x4, scoped, tag = 'scoped memory for fourier_feature_transform.1']
    %9 = vsyncpa [#allocation3], 0
    // Predicated region
    $region2: #{fourier_feature_transform.1} parent=1 // pred_check
      _
    $region3: #{fourier_feature_transform.1} parent=1 // pred_check_branch
      %11 = sbr.rel (0) target = $region5
    $region4: #{fourier_feature_transform.1} parent=1 // pred_region
      _
    $region5: #{fourier_feature_transform.1} parent=1 // pred_fallthru
      _
    // Predicated region
    $region6: #{fourier_feature_transform.1} parent=1 // pred_check
      _
    $region7: #{fourier_feature_transform.1} parent=1 // pred_check_branch
      %13 = sbr.rel (0) target = $region9
    $region8: #{fourier_feature_transform.1} parent=1 // pred_region
      _
    $region9: #{fourier_feature_transform.1} parent=1 // pred_fallthru
      _
    // Predicated region
    $region10: #{fourier_feature_transform.1} parent=1 // pred_check
      _
    $region11: #{fourier_feature_transform.1} parent=1 // pred_check_branch
      %15 = sbr.rel (0) target = $region13
    $region12: #{fourier_feature_transform.1} parent=1 // pred_region
      _
    $region13: #{fourier_feature_transform.1} parent=1 // pred_fallthru
      _
    // Predicated region
    $region14: #{fourier_feature_transform.1} parent=1 // pred_check
      _
    $region15: #{fourier_feature_transform.1} parent=1 // pred_check_branch
      %17 = sbr.rel (0) target = $region17
    $region16: #{fourier_feature_transform.1} parent=1 // pred_region
      _
    $region17: #{fourier_feature_transform.1} parent=1 // pred_fallthru
      _
    %v18 = vld [vmem:[%s0] sm:$0xff]
    %v19 = vld [vmem:[%s1] sm:$0xff]
    %v20 = vld [vmem:[%s2] sm:$0x3]
    %v22 = vlaneseq
    %v23 = vshrl.u32 %v22, 7
    %v24 = vsub.s32 0, %v23
    %v25 = vrot.slane %v20, %v24
    %v26 = vlaneseq
    %v27 = vshrl.u32 %v26, 7
    %v28 = vsub.s32 1, %v27
    %v29 = vrot.slane %v20, %v28
    %v33 = vcombine.high %v19, %v19
    %vm34 = vcmask 31744
    %v36 = vsel %vm34, %v18, 0
    %vm38 = vcmask 1043456
    %v39 = vsel %vm38, %v19, 0
    %v41 = vsel %vm38, %v33, 0
    %v43 = vand.u32 %v41, 4294901760
    %44 = vmatprep.subr.mxu0 %v43
    %v45 = vand.u32 %v39, 4294901760
    %46 = vmatpush1.msra.mxu0 %v45
    %47 = vmatprep.subr.mxu0 0.0
    %48 = vmatpush1.msra.mxu0 0.0
    %49 = vmatprep.subr.mxu0 0.0
    %50 = vmatpush1.msra.mxu0 0.0
    %51 = vmatprep.subr.mxu0 0.0
    %52 = vmatpush1.msra.mxu0 0.0
    %53 = vmatprep.subr.mxu0 0.0
    %54 = vmatpush1.msra.mxu0 0.0
    %55 = vmatprep.subr.mxu0 0.0
    %56 = vmatpush1.msra.mxu0 0.0
    %57 = vmatprep.subr.mxu0 0.0
    %58 = vmatpush1.msra.mxu0 0.0
    %59 = vmatprep.subr.mxu0 0.0
    %60 = vmatpush1.msra.mxu0 0.0
    %61 = vmatprep.subr.mxu0 0.0
    %62 = vmatpush1.msra.mxu0 0.0
    %63 = vmatprep.subr.mxu0 0.0
    %64 = vmatpush1.msra.mxu0 0.0
    %65 = vmatprep.subr.mxu0 0.0
    %66 = vmatpush1.msra.mxu0 0.0
    %67 = vmatprep.subr.mxu0 0.0
    %68 = vmatpush1.msra.mxu0 0.0
    %69 = vmatprep.subr.mxu0 0.0
    %70 = vmatpush1.msra.mxu0 0.0
    %71 = vmatprep.subr.mxu0 0.0
    %72 = vmatpush1.msra.mxu0 0.0
    %73 = vmatprep.subr.mxu0 0.0
    %74 = vmatpush1.msra.mxu0 0.0
    %75 = vmatprep.subr.mxu0 0.0
    %76 = vmatpush1.msra.mxu0 0.0
    %77 = vmatprep.subr.mxu0 0.0
    %78 = vmatpush1.msra.mxu0 0.0
    %79 = vmatprep.subr.mxu0 0.0
    %80 = vmatpush1.msra.mxu0 0.0
    %81 = vmatprep.subr.mxu0 0.0
    %82 = vmatpush1.msra.mxu0 0.0
    %83 = vmatprep.subr.mxu0 0.0
    %84 = vmatpush1.msra.mxu0 0.0
    %85 = vmatprep.subr.mxu0 0.0
    %86 = vmatpush1.msra.mxu0 0.0
    %87 = vmatprep.subr.mxu0 0.0
    %88 = vmatpush1.msra.mxu0 0.0
    %89 = vmatprep.subr.mxu0 0.0
    %90 = vmatpush1.msra.mxu0 0.0
    %91 = vmatprep.subr.mxu0 0.0
    %92 = vmatpush1.msra.mxu0 0.0
    %93 = vmatprep.subr.mxu0 0.0
    %94 = vmatpush1.msra.mxu0 0.0
    %95 = vmatprep.subr.mxu0 0.0
    %96 = vmatpush1.msra.mxu0 0.0
    %97 = vmatprep.subr.mxu0 0.0
    %98 = vmatpush1.msra.mxu0 0.0
    %99 = vmatprep.subr.mxu0 0.0
    %100 = vmatpush1.msra.mxu0 0.0
    %101 = vmatprep.subr.mxu0 0.0
    %102 = vmatpush1.msra.mxu0 0.0
    %103 = vmatprep.subr.mxu0 0.0
    %104 = vmatpush1.msra.mxu0 0.0
    %105 = vmatprep.subr.mxu0 0.0
    %106 = vmatpush1.msra.mxu0 0.0
    %107 = vmatprep.subr.mxu0 0.0
    %108 = vmatpush1.msra.mxu0 0.0
    %109 = vmatprep.mubr.f32.mxu0 0.0
    %v110 = vand.u32 %v36, 4294901760
    %v111 = vsub.f32 %v36, %v110
    %v112 = vand.u32 %v111, 4294901760
    %v113 = vsub.f32 %v111, %v112
    %v114 = vand.u32 %v113, 4294901760
    %115 = vmatmul.mubr.f32.gmra.mrb[0].mxu0 %v114
    %v116 = vpop.f32.mrb[0].mxu0
    %v117 = vadd.f32 %v25, %v116
    %v118 = vpop.f32.mrb[0].mxu0
    %v119 = vadd.f32 %v29, %v118
    %120 = vdwg.mxu0
    %v121 = vand.u32 %v41, 4294901760
    %v122 = vsub.f32 %v41, %v121
    %v123 = vand.u32 %v122, 4294901760
    %v124 = vsub.f32 %v122, %v123
    %v125 = vand.u32 %v124, 4294901760
    %126 = vmatprep.subr.mxu0 %v125
    %v127 = vand.u32 %v39, 4294901760
    %v128 = vsub.f32 %v39, %v127
    %v129 = vand.u32 %v128, 4294901760
    %v130 = vsub.f32 %v128, %v129
    %v131 = vand.u32 %v130, 4294901760
    %132 = vmatpush1.msra.mxu0 %v131
    %133 = vmatprep.subr.mxu0 0.0
    %134 = vmatpush1.msra.mxu0 0.0
    %135 = vmatprep.subr.mxu0 0.0
    %136 = vmatpush1.msra.mxu0 0.0
    %137 = vmatprep.subr.mxu0 0.0
    %138 = vmatpush1.msra.mxu0 0.0
    %139 = vmatprep.subr.mxu0 0.0
    %140 = vmatpush1.msra.mxu0 0.0
    %141 = vmatprep.subr.mxu0 0.0
    %142 = vmatpush1.msra.mxu0 0.0
    %143 = vmatprep.subr.mxu0 0.0
    %144 = vmatpush1.msra.mxu0 0.0
    %145 = vmatprep.subr.mxu0 0.0
    %146 = vmatpush1.msra.mxu0 0.0
    %147 = vmatprep.subr.mxu0 0.0
    %148 = vmatpush1.msra.mxu0 0.0
    %149 = vmatprep.subr.mxu0 0.0
    %150 = vmatpush1.msra.mxu0 0.0
    %151 = vmatprep.subr.mxu0 0.0
    %152 = vmatpush1.msra.mxu0 0.0
    %153 = vmatprep.subr.mxu0 0.0
    %154 = vmatpush1.msra.mxu0 0.0
    %155 = vmatprep.subr.mxu0 0.0
    %156 = vmatpush1.msra.mxu0 0.0
    %157 = vmatprep.subr.mxu0 0.0
    %158 = vmatpush1.msra.mxu0 0.0
    %159 = vmatprep.subr.mxu0 0.0
    %160 = vmatpush1.msra.mxu0 0.0
    %161 = vmatprep.subr.mxu0 0.0
    %162 = vmatpush1.msra.mxu0 0.0
    %163 = vmatprep.subr.mxu0 0.0
    %164 = vmatpush1.msra.mxu0 0.0
    %165 = vmatprep.subr.mxu0 0.0
    %166 = vmatpush1.msra.mxu0 0.0
    %167 = vmatprep.subr.mxu0 0.0
    %168 = vmatpush1.msra.mxu0 0.0
    %169 = vmatprep.subr.mxu0 0.0
    %170 = vmatpush1.msra.mxu0 0.0
    %171 = vmatprep.subr.mxu0 0.0
    %172 = vmatpush1.msra.mxu0 0.0
    %173 = vmatprep.subr.mxu0 0.0
    %174 = vmatpush1.msra.mxu0 0.0
    %175 = vmatprep.subr.mxu0 0.0
    %176 = vmatpush1.msra.mxu0 0.0
    %177 = vmatprep.subr.mxu0 0.0
    %178 = vmatpush1.msra.mxu0 0.0
    %179 = vmatprep.subr.mxu0 0.0
    %180 = vmatpush1.msra.mxu0 0.0
    %181 = vmatprep.subr.mxu0 0.0
    %182 = vmatpush1.msra.mxu0 0.0
    %183 = vmatprep.subr.mxu0 0.0
    %184 = vmatpush1.msra.mxu0 0.0
    %185 = vmatprep.subr.mxu0 0.0
    %186 = vmatpush1.msra.mxu0 0.0
    %187 = vmatprep.subr.mxu0 0.0
    %188 = vmatpush1.msra.mxu0 0.0
    %189 = vmatprep.subr.mxu0 0.0
    %190 = vmatpush1.msra.mxu0 0.0
    %191 = vmatprep.subr.mxu0 0.0
    %192 = vmatpush1.msra.mxu0 0.0
    %193 = vmatprep.subr.mxu0 0.0
    %194 = vmatpush1.msra.mxu0 0.0
    %195 = vmatprep.mubr.f32.mxu0 0.0
    %v196 = vand.u32 %v36, 4294901760
    %197 = vmatmul.mubr.f32.gmra.mrb[0].mxu0 %v196
    %v198 = vpop.f32.mrb[0].mxu0
    %v199 = vadd.f32 %v117, %v198
    %v200 = vpop.f32.mrb[0].mxu0
    %v201 = vadd.f32 %v119, %v200
    %202 = vdwg.mxu0
    %v203 = vand.u32 %v41, 4294901760
    %v204 = vsub.f32 %v41, %v203
    %205 = vmatprep.subr.mxu0 %v204
    %v206 = vand.u32 %v39, 4294901760
    %v207 = vsub.f32 %v39, %v206
    %208 = vmatpush1.msra.mxu0 %v207
    %209 = vmatprep.subr.mxu0 0.0
    %210 = vmatpush1.msra.mxu0 0.0
    %211 = vmatprep.subr.mxu0 0.0
    %212 = vmatpush1.msra.mxu0 0.0
    %213 = vmatprep.subr.mxu0 0.0
    %214 = vmatpush1.msra.mxu0 0.0
    %215 = vmatprep.subr.mxu0 0.0
    %216 = vmatpush1.msra.mxu0 0.0
    %217 = vmatprep.subr.mxu0 0.0
    %218 = vmatpush1.msra.mxu0 0.0
    %219 = vmatprep.subr.mxu0 0.0
    %220 = vmatpush1.msra.mxu0 0.0
    %221 = vmatprep.subr.mxu0 0.0
    %222 = vmatpush1.msra.mxu0 0.0
    %223 = vmatprep.subr.mxu0 0.0
    %224 = vmatpush1.msra.mxu0 0.0
    %225 = vmatprep.subr.mxu0 0.0
    %226 = vmatpush1.msra.mxu0 0.0
    %227 = vmatprep.subr.mxu0 0.0
    %228 = vmatpush1.msra.mxu0 0.0
    %229 = vmatprep.subr.mxu0 0.0
    %230 = vmatpush1.msra.mxu0 0.0
    %231 = vmatprep.subr.mxu0 0.0
    %232 = vmatpush1.msra.mxu0 0.0
    %233 = vmatprep.subr.mxu0 0.0
    %234 = vmatpush1.msra.mxu0 0.0
    %235 = vmatprep.subr.mxu0 0.0
    %236 = vmatpush1.msra.mxu0 0.0
    %237 = vmatprep.subr.mxu0 0.0
    %238 = vmatpush1.msra.mxu0 0.0
    %239 = vmatprep.subr.mxu0 0.0
    %240 = vmatpush1.msra.mxu0 0.0
    %241 = vmatprep.subr.mxu0 0.0
    %242 = vmatpush1.msra.mxu0 0.0
    %243 = vmatprep.subr.mxu0 0.0
    %244 = vmatpush1.msra.mxu0 0.0
    %245 = vmatprep.subr.mxu0 0.0
    %246 = vmatpush1.msra.mxu0 0.0
    %247 = vmatprep.subr.mxu0 0.0
    %248 = vmatpush1.msra.mxu0 0.0
    %249 = vmatprep.subr.mxu0 0.0
    %250 = vmatpush1.msra.mxu0 0.0
    %251 = vmatprep.subr.mxu0 0.0
    %252 = vmatpush1.msra.mxu0 0.0
    %253 = vmatprep.subr.mxu0 0.0
    %254 = vmatpush1.msra.mxu0 0.0
    %255 = vmatprep.subr.mxu0 0.0
    %256 = vmatpush1.msra.mxu0 0.0
    %257 = vmatprep.subr.mxu0 0.0
    %258 = vmatpush1.msra.mxu0 0.0
    %259 = vmatprep.subr.mxu0 0.0
    %260 = vmatpush1.msra.mxu0 0.0
    %261 = vmatprep.subr.mxu0 0.0
    %262 = vmatpush1.msra.mxu0 0.0
    %263 = vmatprep.subr.mxu0 0.0
    %264 = vmatpush1.msra.mxu0 0.0
    %265 = vmatprep.subr.mxu0 0.0
    %266 = vmatpush1.msra.mxu0 0.0
    %267 = vmatprep.subr.mxu0 0.0
    %268 = vmatpush1.msra.mxu0 0.0
    %269 = vmatprep.subr.mxu0 0.0
    %270 = vmatpush1.msra.mxu0 0.0
    %271 = vmatprep.mubr.f32.mxu0 0.0
    %v272 = vand.u32 %v36, 4294901760
    %v273 = vsub.f32 %v36, %v272
    %274 = vmatmul.mubr.f32.gmra.mrb[0].mxu0 %v273
    %v275 = vpop.f32.mrb[0].mxu0
    %v276 = vadd.f32 %v199, %v275
    %v277 = vpop.f32.mrb[0].mxu0
    %v278 = vadd.f32 %v201, %v277
    %279 = vdwg.mxu0
    %v280 = vand.u32 %v41, 4294901760
    %281 = vmatprep.subr.mxu0 %v280
    %v282 = vand.u32 %v39, 4294901760
    %283 = vmatpush1.msra.mxu0 %v282
    %284 = vmatprep.subr.mxu0 0.0
    %285 = vmatpush1.msra.mxu0 0.0
    %286 = vmatprep.subr.mxu0 0.0
    %287 = vmatpush1.msra.mxu0 0.0
    %288 = vmatprep.subr.mxu0 0.0
    %289 = vmatpush1.msra.mxu0 0.0
    %290 = vmatprep.subr.mxu0 0.0
    %291 = vmatpush1.msra.mxu0 0.0
    %292 = vmatprep.subr.mxu0 0.0
    %293 = vmatpush1.msra.mxu0 0.0
    %294 = vmatprep.subr.mxu0 0.0
    %295 = vmatpush1.msra.mxu0 0.0
    %296 = vmatprep.subr.mxu0 0.0
    %297 = vmatpush1.msra.mxu0 0.0
    %298 = vmatprep.subr.mxu0 0.0
    %299 = vmatpush1.msra.mxu0 0.0
    %300 = vmatprep.subr.mxu0 0.0
    %301 = vmatpush1.msra.mxu0 0.0
    %302 = vmatprep.subr.mxu0 0.0
    %303 = vmatpush1.msra.mxu0 0.0
    %304 = vmatprep.subr.mxu0 0.0
    %305 = vmatpush1.msra.mxu0 0.0
    %306 = vmatprep.subr.mxu0 0.0
    %307 = vmatpush1.msra.mxu0 0.0
    %308 = vmatprep.subr.mxu0 0.0
    %309 = vmatpush1.msra.mxu0 0.0
    %310 = vmatprep.subr.mxu0 0.0
    %311 = vmatpush1.msra.mxu0 0.0
    %312 = vmatprep.subr.mxu0 0.0
    %313 = vmatpush1.msra.mxu0 0.0
    %314 = vmatprep.subr.mxu0 0.0
    %315 = vmatpush1.msra.mxu0 0.0
    %316 = vmatprep.subr.mxu0 0.0
    %317 = vmatpush1.msra.mxu0 0.0
    %318 = vmatprep.subr.mxu0 0.0
    %319 = vmatpush1.msra.mxu0 0.0
    %320 = vmatprep.subr.mxu0 0.0
    %321 = vmatpush1.msra.mxu0 0.0
    %322 = vmatprep.subr.mxu0 0.0
    %323 = vmatpush1.msra.mxu0 0.0
    %324 = vmatprep.subr.mxu0 0.0
    %325 = vmatpush1.msra.mxu0 0.0
    %326 = vmatprep.subr.mxu0 0.0
    %327 = vmatpush1.msra.mxu0 0.0
    %328 = vmatprep.subr.mxu0 0.0
    %329 = vmatpush1.msra.mxu0 0.0
    %330 = vmatprep.subr.mxu0 0.0
    %331 = vmatpush1.msra.mxu0 0.0
    %332 = vmatprep.subr.mxu0 0.0
    %333 = vmatpush1.msra.mxu0 0.0
    %334 = vmatprep.subr.mxu0 0.0
    %335 = vmatpush1.msra.mxu0 0.0
    %336 = vmatprep.subr.mxu0 0.0
    %337 = vmatpush1.msra.mxu0 0.0
    %338 = vmatprep.subr.mxu0 0.0
    %339 = vmatpush1.msra.mxu0 0.0
    %340 = vmatprep.subr.mxu0 0.0
    %341 = vmatpush1.msra.mxu0 0.0
    %342 = vmatprep.subr.mxu0 0.0
    %343 = vmatpush1.msra.mxu0 0.0
    %344 = vmatprep.subr.mxu0 0.0
    %345 = vmatpush1.msra.mxu0 0.0
    %346 = vmatprep.mubr.f32.mxu0 0.0
    %v347 = vand.u32 %v36, 4294901760
    %v348 = vsub.f32 %v36, %v347
    %v349 = vand.u32 %v348, 4294901760
    %350 = vmatmul.mubr.f32.gmra.mrb[0].mxu0 %v349
    %v351 = vpop.f32.mrb[0].mxu0
    %v352 = vadd.f32 %v276, %v351
    %v353 = vpop.f32.mrb[0].mxu0
    %v354 = vadd.f32 %v278, %v353
    %355 = vdwg.mxu0
    %v356 = vand.u32 %v41, 4294901760
    %v357 = vsub.f32 %v41, %v356
    %v358 = vand.u32 %v357, 4294901760
    %359 = vmatprep.subr.mxu0 %v358
    %v360 = vand.u32 %v39, 4294901760
    %v361 = vsub.f32 %v39, %v360
    %v362 = vand.u32 %v361, 4294901760
    %363 = vmatpush1.msra.mxu0 %v362
    %364 = vmatprep.subr.mxu0 0.0
    %365 = vmatpush1.msra.mxu0 0.0
    %366 = vmatprep.subr.mxu0 0.0
    %367 = vmatpush1.msra.mxu0 0.0
    %368 = vmatprep.subr.mxu0 0.0
    %369 = vmatpush1.msra.mxu0 0.0
    %370 = vmatprep.subr.mxu0 0.0
    %371 = vmatpush1.msra.mxu0 0.0
    %372 = vmatprep.subr.mxu0 0.0
    %373 = vmatpush1.msra.mxu0 0.0
    %374 = vmatprep.subr.mxu0 0.0
    %375 = vmatpush1.msra.mxu0 0.0
    %376 = vmatprep.subr.mxu0 0.0
    %377 = vmatpush1.msra.mxu0 0.0
    %378 = vmatprep.subr.mxu0 0.0
    %379 = vmatpush1.msra.mxu0 0.0
    %380 = vmatprep.subr.mxu0 0.0
    %381 = vmatpush1.msra.mxu0 0.0
    %382 = vmatprep.subr.mxu0 0.0
    %383 = vmatpush1.msra.mxu0 0.0
    %384 = vmatprep.subr.mxu0 0.0
    %385 = vmatpush1.msra.mxu0 0.0
    %386 = vmatprep.subr.mxu0 0.0
    %387 = vmatpush1.msra.mxu0 0.0
    %388 = vmatprep.subr.mxu0 0.0
    %389 = vmatpush1.msra.mxu0 0.0
    %390 = vmatprep.subr.mxu0 0.0
    %391 = vmatpush1.msra.mxu0 0.0
    %392 = vmatprep.subr.mxu0 0.0
    %393 = vmatpush1.msra.mxu0 0.0
    %394 = vmatprep.subr.mxu0 0.0
    %395 = vmatpush1.msra.mxu0 0.0
    %396 = vmatprep.subr.mxu0 0.0
    %397 = vmatpush1.msra.mxu0 0.0
    %398 = vmatprep.subr.mxu0 0.0
    %399 = vmatpush1.msra.mxu0 0.0
    %400 = vmatprep.subr.mxu0 0.0
    %401 = vmatpush1.msra.mxu0 0.0
    %402 = vmatprep.subr.mxu0 0.0
    %403 = vmatpush1.msra.mxu0 0.0
    %404 = vmatprep.subr.mxu0 0.0
    %405 = vmatpush1.msra.mxu0 0.0
    %406 = vmatprep.subr.mxu0 0.0
    %407 = vmatpush1.msra.mxu0 0.0
    %408 = vmatprep.subr.mxu0 0.0
    %409 = vmatpush1.msra.mxu0 0.0
    %410 = vmatprep.subr.mxu0 0.0
    %411 = vmatpush1.msra.mxu0 0.0
    %412 = vmatprep.subr.mxu0 0.0
    %413 = vmatpush1.msra.mxu0 0.0
    %414 = vmatprep.subr.mxu0 0.0
    %415 = vmatpush1.msra.mxu0 0.0
    %416 = vmatprep.subr.mxu0 0.0
    %417 = vmatpush1.msra.mxu0 0.0
    %418 = vmatprep.subr.mxu0 0.0
    %419 = vmatpush1.msra.mxu0 0.0
    %420 = vmatprep.subr.mxu0 0.0
    %421 = vmatpush1.msra.mxu0 0.0
    %422 = vmatprep.subr.mxu0 0.0
    %423 = vmatpush1.msra.mxu0 0.0
    %424 = vmatprep.subr.mxu0 0.0
    %425 = vmatpush1.msra.mxu0 0.0
    %426 = vmatprep.mubr.f32.mxu0 0.0
    %v427 = vand.u32 %v36, 4294901760
    %428 = vmatmul.mubr.f32.gmra.mrb[0].mxu0 %v427
    %v429 = vpop.f32.mrb[0].mxu0
    %v430 = vadd.f32 %v352, %v429
    %v431 = vpop.f32.mrb[0].mxu0
    %v432 = vadd.f32 %v354, %v431
    %433 = vdwg.mxu0
    %v434 = vand.u32 %v41, 4294901760
    %435 = vmatprep.subr.mxu0 %v434
    %v436 = vand.u32 %v39, 4294901760
    %437 = vmatpush1.msra.mxu0 %v436
    %438 = vmatprep.subr.mxu0 0.0
    %439 = vmatpush1.msra.mxu0 0.0
    %440 = vmatprep.subr.mxu0 0.0
    %441 = vmatpush1.msra.mxu0 0.0
    %442 = vmatprep.subr.mxu0 0.0
    %443 = vmatpush1.msra.mxu0 0.0
    %444 = vmatprep.subr.mxu0 0.0
    %445 = vmatpush1.msra.mxu0 0.0
    %446 = vmatprep.subr.mxu0 0.0
    %447 = vmatpush1.msra.mxu0 0.0
    %448 = vmatprep.subr.mxu0 0.0
    %449 = vmatpush1.msra.mxu0 0.0
    %450 = vmatprep.subr.mxu0 0.0
    %451 = vmatpush1.msra.mxu0 0.0
    %452 = vmatprep.subr.mxu0 0.0
    %453 = vmatpush1.msra.mxu0 0.0
    %454 = vmatprep.subr.mxu0 0.0
    %455 = vmatpush1.msra.mxu0 0.0
    %456 = vmatprep.subr.mxu0 0.0
    %457 = vmatpush1.msra.mxu0 0.0
    %458 = vmatprep.subr.mxu0 0.0
    %459 = vmatpush1.msra.mxu0 0.0
    %460 = vmatprep.subr.mxu0 0.0
    %461 = vmatpush1.msra.mxu0 0.0
    %462 = vmatprep.subr.mxu0 0.0
    %463 = vmatpush1.msra.mxu0 0.0
    %464 = vmatprep.subr.mxu0 0.0
    %465 = vmatpush1.msra.mxu0 0.0
    %466 = vmatprep.subr.mxu0 0.0
    %467 = vmatpush1.msra.mxu0 0.0
    %468 = vmatprep.subr.mxu0 0.0
    %469 = vmatpush1.msra.mxu0 0.0
    %470 = vmatprep.subr.mxu0 0.0
    %471 = vmatpush1.msra.mxu0 0.0
    %472 = vmatprep.subr.mxu0 0.0
    %473 = vmatpush1.msra.mxu0 0.0
    %474 = vmatprep.subr.mxu0 0.0
    %475 = vmatpush1.msra.mxu0 0.0
    %476 = vmatprep.subr.mxu0 0.0
    %477 = vmatpush1.msra.mxu0 0.0
    %478 = vmatprep.subr.mxu0 0.0
    %479 = vmatpush1.msra.mxu0 0.0
    %480 = vmatprep.subr.mxu0 0.0
    %481 = vmatpush1.msra.mxu0 0.0
    %482 = vmatprep.subr.mxu0 0.0
    %483 = vmatpush1.msra.mxu0 0.0
    %484 = vmatprep.subr.mxu0 0.0
    %485 = vmatpush1.msra.mxu0 0.0
    %486 = vmatprep.subr.mxu0 0.0
    %487 = vmatpush1.msra.mxu0 0.0
    %488 = vmatprep.subr.mxu0 0.0
    %489 = vmatpush1.msra.mxu0 0.0
    %490 = vmatprep.subr.mxu0 0.0
    %491 = vmatpush1.msra.mxu0 0.0
    %492 = vmatprep.subr.mxu0 0.0
    %493 = vmatpush1.msra.mxu0 0.0
    %494 = vmatprep.subr.mxu0 0.0
    %495 = vmatpush1.msra.mxu0 0.0
    %496 = vmatprep.subr.mxu0 0.0
    %497 = vmatpush1.msra.mxu0 0.0
    %498 = vmatprep.subr.mxu0 0.0
    %499 = vmatpush1.msra.mxu0 0.0
    %500 = vmatprep.mubr.f32.mxu0 0.0
    %v501 = vand.u32 %v36, 4294901760
    %502 = vmatmul.mubr.f32.gmra.mrb[0].mxu0 %v501
    %v503 = vpop.f32.mrb[0].mxu0
    %v504 = vadd.f32 %v430, %v503
    %v505 = vpop.f32.mrb[0].mxu0
    %v506 = vadd.f32 %v432, %v505
    %507 = vdwg.mxu0
    %v508 = vld [vmem:[%s3] sm:$0x3]
    %vm509 = vcmp.gt.f32.partialorder %v508, 0.5
    %v510 = vand.u32 2147483647, %v504
    %vm511 = vcmp.le.f32.partialorder %v510, 0.7853982
    %vm512 = vcmp.lt.s32.totalorder %v504, 0
    %v513 = vand.u32 %v504, 2139095040
    %v514 = vshrl.u32 %v513, 23
    %v515 = vsub.s32 %v514, 127
    %v516 = vand.u32 2147483647, %v504
    %v517 = vand.u32 %v516, 8388607
    %v518 = vor.u32 %v517, 8388608
    %v519 = vsub.s32 0, %v518
    %v520 = vadd.s32 %v515, 1
    %vm521 = vcmp.gt.s32.totalorder %v520, 0
    %v522 = vsel %vm521, %v520, 0
    %v523 = vshrl.u32 %v522, 5
    %v524 = vand.u32 %v522, 31
    %v525 = vsub.s32 32, %v524
    %v526 = vshrl.u32 683565275, %v525
    %v527 = vshll.u32 683565275, %v524
    %v528 = vshrl.u32 2475754826, %v525
    %v529 = vor.u32 %v527, %v528
    %v530 = vshll.u32 2475754826, %v524
    %v531 = vshrl.u32 2131351028, %v525
    %v532 = vor.u32 %v530, %v531
    %v533 = vshll.u32 2131351028, %v524
    %v534 = vshrl.u32 2102212464, %v525
    %v535 = vor.u32 %v533, %v534
    %v536 = vshll.u32 2102212464, %v524
    %v537 = vshrl.u32 920167782, %v525
    %v538 = vor.u32 %v536, %v537
    %v539 = vshll.u32 920167782, %v524
    %v540 = vshrl.u32 1326507024, %v525
    %v541 = vor.u32 %v539, %v540
    %vm542 = vcmp.lt.s32.totalorder %v523, 1
    %vm543 = vcmp.lt.s32.totalorder %v523, 2
    %vm544 = vcmp.lt.s32.totalorder %v523, 3
    %vm545 = vcmp.lt.s32.totalorder %v523, 4
    %v546 = vsel %vm542, %v526, %v529
    %v547 = vsel %vm545, %v535, 2102212464
    %v548 = vsel %vm544, %v532, %v547
    %v549 = vsel %vm543, %v546, %v548
    %v550 = vsel %vm542, %v529, %v532
    %v551 = vsel %vm545, %v538, 920167782
    %v552 = vsel %vm544, %v535, %v551
    %v553 = vsel %vm543, %v550, %v552
    %v554 = vsel %vm542, %v532, %v535
    %v555 = vsel %vm545, %v541, 1326507024
    %v556 = vsel %vm544, %v538, %v555
    %v557 = vsel %vm543, %v554, %v556
    %v558 = vshll.u32 %v518, 8
    %v559 = vmul.u32.u64.compose %v558, %v557
    %v560 = vextract.low.u32 %v559
    %v561 = vextract.high.u32 %v559
    %v562 = vmul.u32.u64.compose %v558, %v553
    %v563 = vextract.low.u32 %v562
    %v564 = vextract.high.u32 %v562
    %v565 = vmul.u32 %v558, %v549
    %v566 = vadd.s32 %v561, %v563
    %vm567 = vc.u32 %v561, %v563
    %v568 = vadd.s32 %v564, 1
    %v569 = vsel %vm567, %v568, %v564
    %v570 = vadd.s32 %v565, %v569
    %v571 = vadd.s32 %v570, 536870912
    %v572 = vshrl.u32 %v571, 30
    %v573 = vshll.u32 %v572, 30
    %v574 = vsub.s32 %v570, %v573
    %vm575 = vcmp.lt.s32.totalorder %v574, 0
    %v576 = vsub.s32 0, %v574
    %v577 = vsel %vm575, %v576, %v574
    %v578 = vclz %v577
    %v579 = vsub.s32 %v578, 2
    %vm580 = vcmp.gt.s32.totalorder 0, %v579
    %v581 = vsel %vm580, 0, %v579
    %v582 = vsub.s32 32, %v581
    %v583 = vshll.u32 %v574, %v581
    %v584 = vshrl.u32 %v566, %v582
    %v585 = vor.u32 %v583, %v584
    %v586 = vsub.s32 4294967266, %v581
    %v587 = vadd.s32 %v586, 127
    %v588 = vshll.u32 %v587, 23
    %v589 = vor.u32 4788187, %v588
    %v590 = vand.u32 2147483647, %v589
    %v592 = vcvt.s32.f32 %v585
    %v593 = vmul.f32 %v592, %v590
    %v594 = vxor.u32 %v593, 2147483648
    %v595 = vsel %vm512, %v594, %v593
    %v596 = vsub.s32 4, %v572
    %v597 = vsel %vm512, %v596, %v572
    %v598 = vsel %vm511, %v504, %v595
    %v599 = vsel %vm511, 0, %v597
    %v600 = vcosq.f32.pop %v598
    %v601 = vsinq.f32.pop %v598
    %vm602 = vweird.f32 %v504
    %v603 = vadd.s32 %v599, 3
    %v604 = vand.u32 %v603, 3
    %vm605 = vcmp.lt.s32.totalorder %v604, 2
    %vm606 = vcmp.eq.s32.totalorder %v604, 0
    %v607 = vxor.u32 %v601, 2147483648
    %v608 = vsel %vm606, %v600, %v607
    %vm609 = vcmp.eq.s32.totalorder %v604, 2
    %v610 = vxor.u32 %v600, 2147483648
    %v611 = vsel %vm609, %v610, %v601
    %v612 = vsel %vm605, %v608, %v611
    %v613 = vsel %vm602, nan, %v612
    %v614 = vand.u32 2147483647, %v506
    %vm615 = vcmp.le.f32.partialorder %v614, 0.7853982
    %vm616 = vcmp.lt.s32.totalorder %v506, 0
    %v617 = vand.u32 %v506, 2139095040
    %v618 = vshrl.u32 %v617, 23
    %v619 = vsub.s32 %v618, 127
    %v620 = vand.u32 2147483647, %v506
    %v621 = vand.u32 %v620, 8388607
    %v622 = vor.u32 %v621, 8388608
    %v623 = vsub.s32 0, %v622
    %v624 = vadd.s32 %v619, 1
    %vm625 = vcmp.gt.s32.totalorder %v624, 0
    %v626 = vsel %vm625, %v624, 0
    %v627 = vshrl.u32 %v626, 5
    %v628 = vand.u32 %v626, 31
    %v629 = vsub.s32 32, %v628
    %v630 = vshrl.u32 683565275, %v629
    %v631 = vshll.u32 683565275, %v628
    %v632 = vshrl.u32 2475754826, %v629
    %v633 = vor.u32 %v631, %v632
    %v634 = vshll.u32 2475754826, %v628
    %v635 = vshrl.u32 2131351028, %v629
    %v636 = vor.u32 %v634, %v635
    %v637 = vshll.u32 2131351028, %v628
    %v638 = vshrl.u32 2102212464, %v629
    %v639 = vor.u32 %v637, %v638
    %v640 = vshll.u32 2102212464, %v628
    %v641 = vshrl.u32 920167782, %v629
    %v642 = vor.u32 %v640, %v641
    %v643 = vshll.u32 920167782, %v628
    %v644 = vshrl.u32 1326507024, %v629
    %v645 = vor.u32 %v643, %v644
    %vm646 = vcmp.lt.s32.totalorder %v627, 1
    %vm647 = vcmp.lt.s32.totalorder %v627, 2
    %vm648 = vcmp.lt.s32.totalorder %v627, 3
    %vm649 = vcmp.lt.s32.totalorder %v627, 4
    %v650 = vsel %vm646, %v630, %v633
    %v651 = vsel %vm649, %v639, 2102212464
    %v652 = vsel %vm648, %v636, %v651
    %v653 = vsel %vm647, %v650, %v652
    %v654 = vsel %vm646, %v633, %v636
    %v655 = vsel %vm649, %v642, 920167782
    %v656 = vsel %vm648, %v639, %v655
    %v657 = vsel %vm647, %v654, %v656
    %v658 = vsel %vm646, %v636, %v639
    %v659 = vsel %vm649, %v645, 1326507024
    %v660 = vsel %vm648, %v642, %v659
    %v661 = vsel %vm647, %v658, %v660
    %v662 = vshll.u32 %v622, 8
    %v663 = vmul.u32.u64.compose %v662, %v661
    %v664 = vextract.low.u32 %v663
    %v665 = vextract.high.u32 %v663
    %v666 = vmul.u32.u64.compose %v662, %v657
    %v667 = vextract.low.u32 %v666
    %v668 = vextract.high.u32 %v666
    %v669 = vmul.u32 %v662, %v653
    %v670 = vadd.s32 %v665, %v667
    %vm671 = vc.u32 %v665, %v667
    %v672 = vadd.s32 %v668, 1
    %v673 = vsel %vm671, %v672, %v668
    %v674 = vadd.s32 %v669, %v673
    %v675 = vadd.s32 %v674, 536870912
    %v676 = vshrl.u32 %v675, 30
    %v677 = vshll.u32 %v676, 30
    %v678 = vsub.s32 %v674, %v677
    %vm679 = vcmp.lt.s32.totalorder %v678, 0
    %v680 = vsub.s32 0, %v678
    %v681 = vsel %vm679, %v680, %v678
    %v682 = vclz %v681
    %v683 = vsub.s32 %v682, 2
    %vm684 = vcmp.gt.s32.totalorder 0, %v683
    %v685 = vsel %vm684, 0, %v683
    %v686 = vsub.s32 32, %v685
    %v687 = vshll.u32 %v678, %v685
    %v688 = vshrl.u32 %v670, %v686
    %v689 = vor.u32 %v687, %v688
    %v690 = vsub.s32 4294967266, %v685
    %v691 = vadd.s32 %v690, 127
    %v692 = vshll.u32 %v691, 23
    %v693 = vor.u32 4788187, %v692
    %v694 = vand.u32 2147483647, %v693
    %v696 = vcvt.s32.f32 %v689
    %v697 = vmul.f32 %v696, %v694
    %v698 = vxor.u32 %v697, 2147483648
    %v699 = vsel %vm616, %v698, %v697
    %v700 = vsub.s32 4, %v676
    %v701 = vsel %vm616, %v700, %v676
    %v702 = vsel %vm615, %v506, %v699
    %v703 = vsel %vm615, 0, %v701
    %v704 = vcosq.f32.pop %v702
    %v705 = vsinq.f32.pop %v702
    %vm706 = vweird.f32 %v506
    %v707 = vadd.s32 %v703, 3
    %v708 = vand.u32 %v707, 3
    %vm709 = vcmp.lt.s32.totalorder %v708, 2
    %vm710 = vcmp.eq.s32.totalorder %v708, 0
    %v711 = vxor.u32 %v705, 2147483648
    %v712 = vsel %vm710, %v704, %v711
    %vm713 = vcmp.eq.s32.totalorder %v708, 2
    %v714 = vxor.u32 %v704, 2147483648
    %v715 = vsel %vm713, %v714, %v705
    %v716 = vsel %vm709, %v712, %v715
    %v717 = vsel %vm706, nan, %v716
    %v718 = vsel %vm509, 1, 0
    %v719 = vlaneseq
    %v720 = vshrl.u32 %v719, 7
    %v721 = vsub.s32 0, %v720
    %v722 = vrot.slane %v718, %v721
    %v723 = vlaneseq
    %v724 = vshrl.u32 %v723, 7
    %v725 = vsub.s32 1, %v724
    %v726 = vrot.slane %v718, %v725
    %vm727 = vcmp.eq.s32.totalorder %v722, 1
    %vm728 = vcmp.eq.s32.totalorder %v726, 1
    %v729 = vsel %vm727, %v613, %v504
    %v730 = vsel %vm728, %v717, %v506
    %731 = vst [vmem:[#allocation2] sm:$0xff] %v729
    %732 = vst.msk [vmem:[#allocation2 + $0x8] sm:$0xff] %vm34, %v730
    // Predicated region
    $region18: #{fourier_feature_transform.1} parent=1 // pred_check
      _
    $region19: #{fourier_feature_transform.1} parent=1 // pred_check_branch
      %734 = sbr.rel (0) target = $region21
    $region20: #{fourier_feature_transform.1} parent=1 // pred_region
      %s736 = ssub.s32 256, 256
      %737 = vsyncadd [#allocation3], %s736
      %s739 = sshll.u32 [#allocation2], 4
      %s740 = int_to_ptr.vmem [resolvable:$true] %s739
      %742 = dma.vmem_to_hbm [thread:$0]  %s740, 256, %s4, [#allocation3]
    $region21: #{fourier_feature_transform.1} parent=1 // pred_fallthru
      _
    // Predicated region
    $region22: #{fourier_feature_transform.1} parent=1 // pred_check
      _
    $region23: #{fourier_feature_transform.1} parent=1 // pred_check_branch
      %744 = sbr.rel (0) target = $region25
    $region24: #{fourier_feature_transform.1} parent=1 // pred_region
      %745 = dma.done [#allocation3], 256
    $region25: #{fourier_feature_transform.1} parent=1 // pred_fallthru
      _
    %746 = vsyncpa [#allocation3], 1

</llo_original>
